<compile_context>
chip_gen: v5e
topology: v5e:2x2
jax: 0.10.0
libtpu: 0.0.40
codegen_flags: <defaults>
</compile_context>

<pallas_src>
import functools

import jax
import jax.numpy as jnp
import numpy as np
from jax.experimental import pallas as pl
from jax.experimental.pallas import tpu as pltpu

EPS = 1e-5


def _double_conv_kernel(x_ref, w1_ref, b1_ref, w2_ref, b2_ref, mask_ref,
                        o_ref, mid_ref, xs1_ref, xs2_ref, *, H, W, B):
    # x_ref   : (B, Cin, Le)      halo+1-lane-margin padded flat images
    # w1_ref  : (Cmid, 9*Cin)     conv1 weights with BN1 scale folded in
    # b1_ref  : (Cmid, 1)         BN1 shift (f32)
    # w2_ref  : (Cout, 9*Cmid)    conv2 weights with BN2 scale folded in
    # b2_ref  : (Cout, 1)         BN2 shift (f32)
    # mask_ref: (1, Lout)         1.0 on real pixels, 0.0 on left/right halo cols
    # o_ref   : (B, Cout, Lout)   interior-rows-only flat output
    # mid_ref : VMEM (Cmid, Le)   conv1 activation in padded-flat form
    # xs1_ref : VMEM (9*Cin, Lout)   tap-stacked conv1 operand (K = 9*Cin)
    # xs2_ref : VMEM (9*Cmid, Lout)  tap-stacked conv2 operand (K = 9*Cmid)
    Wp = W + 2
    Lout = H * Wp                 # interior rows only (top/bottom halo rows skipped)
    Le = (H + 2) * Wp + 2         # full padded flat length + 1-lane margin each side
    base = 1 + Wp                 # flat margin (1) + top halo row (Wp)
    cin = x_ref.shape[1]
    cmid = mid_ref.shape[0]

    # Tap offsets in flat padded coordinates, dy-major / dx-minor (matches the
    # host-side weight reshape).
    offs = [(dy - 1) * Wp + (dx - 1) for dy in range(3) for dx in range(3)]

    # The halo rows + flat margins of the conv1 activation are always zero and
    # only the interior slab is rewritten per image, so zero them once per grid
    # step (tiny: 2 * Cmid * (Wp+1) elements).  Done every step (not program_id
    # gated) so it is safe under megacore grid splitting.
    mid_ref[:, 0:base] = jnp.zeros((cmid, base), mid_ref.dtype)
    mid_ref[:, Le - base:Le] = jnp.zeros((cmid, base), mid_ref.dtype)

    # Grid-invariant operands: load once per step, reuse across the image loop.
    w1 = w1_ref[...]
    b1 = b1_ref[...]
    w2 = w2_ref[...]
    b2 = b2_ref[...]
    mask = mask_ref[...]

    for b in range(B):
        x = x_ref[b]                                   # (Cin, Le)

        # ---- conv1: stack the 9 lane-shifted views -> one K = 9*Cin matmul ----
        for t, off in enumerate(offs):
            xs1_ref[t * cin:(t + 1) * cin, :] = x[:, base + off: base + off + Lout]
        acc1 = jnp.dot(w1, xs1_ref[...], preferred_element_type=jnp.float32)

        # BN1 shift (scale already folded into w1) + ReLU; the mask zeroes the
        # left/right halo columns so the stored activation doubles as conv2's
        # zero padding.
        y1 = jnp.maximum(acc1 + b1, 0.0) * mask
        mid_ref[:, base: base + Lout] = y1.astype(mid_ref.dtype)

        # ---- conv2: same tap-stacking on the conv1 activation ----
        mid = mid_ref[...]                             # (Cmid, Le)
        for t, off in enumerate(offs):
            xs2_ref[t * cmid:(t + 1) * cmid, :] = mid[:, base + off: base + off + Lout]
        acc2 = jnp.dot(w2, xs2_ref[...], preferred_element_type=jnp.float32)

        # BN2 shift + ReLU; lane-dense store of interior rows only.
        o_ref[b] = jnp.maximum(acc2 + b2, 0.0).astype(o_ref.dtype)


def _pick_batch_block(n):
    """Largest divisor of n that is <= 8 and leaves >= 2 grid steps (megacore)."""
    cap = max(1, min(8, n // 2 if n >= 2 else 1))
    for b in range(cap, 0, -1):
        if n % b == 0:
            return b
    return 1


def double_conv_x(x_nchw, params, *, compute_dtype=jnp.bfloat16, batch_block=None):
    """Forward pass matching DoubleConvX (eval-mode BN). Input/output are NCHW f32.

    compute_dtype controls the matmul operand / scratch dtype (bf16 default on
    every TPU generation); accumulation and element-wise math are always f32.
    """
    (w1, g1, be1, m1, v1, w2, g2, be2, m2, v2) = params
    N, Cin, H, W = x_nchw.shape
    cmid = w1.shape[0]
    cout = w2.shape[0]
    Hp, Wp = H + 2, W + 2
    L = Hp * Wp                 # full padded flat length
    Lout = H * Wp               # interior rows only
    Le = L + 2                  # + 1-lane flat margin each side

    # Fold eval-mode BN: scale goes into the conv weights, shift stays additive.
    s1 = g1 / jnp.sqrt(v1 + EPS)
    s2 = g2 / jnp.sqrt(v2 + EPS)
    # PyTorch OIHW -> (O, 9*I) with column index (dy*3+dx)*I + i (dy-major).
    w1f = (jnp.transpose(w1, (0, 2, 3, 1)).reshape(cmid, 9 * Cin)
           * s1[:, None]).astype(compute_dtype)
    w2f = (jnp.transpose(w2, (0, 2, 3, 1)).reshape(cout, 9 * cmid)
           * s2[:, None]).astype(compute_dtype)
    b1 = (be1 - m1 * s1).reshape(cmid, 1).astype(jnp.float32)
    b2 = (be2 - m2 * s2).reshape(cout, 1).astype(jnp.float32)

    # NCHW is already channel-major for the flipped layout: zero-pad the 1-pixel
    # spatial halo, flatten (Hp, Wp) onto the lane axis, add a 1-lane flat margin
    # so every 3x3 tap of every interior-row output is an in-bounds static slice.
    xp = jnp.pad(x_nchw.astype(compute_dtype), ((0, 0), (0, 0), (1, 1), (1, 1)))
    xe = jnp.pad(xp.reshape(N, Cin, L), ((0, 0), (0, 0), (1, 1)))

    # Interior-row mask: 1 on real pixels, 0 on the left/right halo columns.
    mask = jnp.pad(jnp.ones((H, W), jnp.float32), ((0, 0), (1, 1))).reshape(1, Lout)

    B = _pick_batch_block(N) if batch_block is None else batch_block
    assert N % B == 0, "batch_block must divide the batch size"

    kernel = functools.partial(_double_conv_kernel, H=H, W=W, B=B)

    out_flat = pl.pallas_call(
        kernel,
        out_shape=jax.ShapeDtypeStruct((N, cout, Lout), jnp.float32),
        grid_spec=pltpu.PrefetchScalarGridSpec(
            num_scalar_prefetch=0,
            grid=(N // B,),
            in_specs=[
                pl.BlockSpec((B, Cin, Le), lambda n: (n, 0, 0)),
                pl.BlockSpec((cmid, 9 * Cin), lambda n: (0, 0)),
                pl.BlockSpec((cmid, 1), lambda n: (0, 0)),
                pl.BlockSpec((cout, 9 * cmid), lambda n: (0, 0)),
                pl.BlockSpec((cout, 1), lambda n: (0, 0)),
                pl.BlockSpec((1, Lout), lambda n: (0, 0)),
            ],
            out_specs=pl.BlockSpec((B, cout, Lout), lambda n: (n, 0, 0)),
            scratch_shapes=[
                pltpu.VMEM((cmid, Le), compute_dtype),        # conv1 activation
                pltpu.VMEM((9 * Cin, Lout), compute_dtype),   # tap-stacked conv1 operand
                pltpu.VMEM((9 * cmid, Lout), compute_dtype),  # tap-stacked conv2 operand
            ],
        ),
        compiler_params=pltpu.CompilerParams(dimension_semantics=("parallel",)),
    )(xe, w1f, b1, w2f, b2, mask)

    # (N, Cout, H, Wp) -> drop the left/right halo columns -> NCHW, no transpose.
    return out_flat.reshape(N, cout, H, Wp)[:, :, :, 1:W + 1]


def init_params(key, in_channels, out_channels, mid_channels=None):
    """Deterministic synthetic parameters with the shapes DoubleConvX.__init__ creates."""
    if not mid_channels:
        mid_channels = out_channels
    ks = jax.random.split(key, 10)
    w1 = 0.2 * jax.random.normal(ks[0], (mid_channels, in_channels, 3, 3), jnp.float32)
    g1 = 1.0 + 0.1 * jax.random.normal(ks[1], (mid_channels,), jnp.float32)
    be1 = 0.1 * jax.random.normal(ks[2], (mid_channels,), jnp.float32)
    m1 = 0.1 * jax.random.normal(ks[3], (mid_channels,), jnp.float32)
    v1 = 0.5 + jax.random.uniform(ks[4], (mid_channels,), jnp.float32)
    w2 = 0.2 * jax.random.normal(ks[5], (out_channels, mid_channels, 3, 3), jnp.float32)
    g2 = 1.0 + 0.1 * jax.random.normal(ks[6], (out_channels,), jnp.float32)
    be2 = 0.1 * jax.random.normal(ks[7], (out_channels,), jnp.float32)
    m2 = 0.1 * jax.random.normal(ks[8], (out_channels,), jnp.float32)
    v2 = 0.5 + jax.random.uniform(ks[9], (out_channels,), jnp.float32)
    return (w1, g1, be1, m1, v1, w2, g2, be2, m2, v2)


def reference_double_conv_x(x_nchw, params):
    """Pure-JAX (XLA) reference with identical eval-mode semantics, in NCHW."""
    (w1, g1, be1, m1, v1, w2, g2, be2, m2, v2) = params

    def conv(x, w):
        return jax.lax.conv_general_dilated(
            x, w, window_strides=(1, 1), padding="SAME",
            dimension_numbers=("NCHW", "OIHW", "NCHW"))

    def bn(x, g, b, m, v):
        return ((x - m[None, :, None, None]) / jnp.sqrt(v[None, :, None, None] + EPS)
                * g[None, :, None, None] + b[None, :, None, None])

    y = jnp.maximum(bn(conv(x_nchw, w1), g1, be1, m1, v1), 0.0)
    y = jnp.maximum(bn(conv(y, w2), g2, be2, m2, v2), 0.0)
    return y


if __name__ == "__main__":
    key = jax.random.PRNGKey(0)
    k_x, k_p = jax.random.split(key)

    N, Cin, H, W = 2, 4, 16, 16
    Cout = 8
    x = jax.random.normal(k_x, (N, Cin, H, W), jnp.float32)
    params = init_params(k_p, Cin, Cout)

    ref = jax.block_until_ready(reference_double_conv_x(x, params))

    # Default bf16 matmul-operand path (fast on v5e/v6e/v7x; f32 accumulation).
    out_bf16 = jax.block_until_ready(double_conv_x(x, params))
    np.testing.assert_allclose(np.asarray(out_bf16), np.asarray(ref), rtol=1e-1, atol=1e-1)

    # Full-f32 path: tight tolerance sanity check of the fused kernel math.
    out_f32 = jax.block_until_ready(double_conv_x(x, params, compute_dtype=jnp.float32))
    np.testing.assert_allclose(np.asarray(out_f32), np.asarray(ref), rtol=1e-3, atol=1e-3)

    print("KERNEL_OK")
</pallas_src>

<mosaic_0001>
module attributes {stable_mosaic.version = 11 : i64} {
  func.func @_double_conv_kernel(%arg0: i32, %arg1: memref<1x4x326xbf16, #tpu.memory_space<vmem>>, %arg2: memref<8x36xbf16, #tpu.memory_space<vmem>>, %arg3: memref<8x1xf32, #tpu.memory_space<vmem>>, %arg4: memref<8x72xbf16, #tpu.memory_space<vmem>>, %arg5: memref<8x1xf32, #tpu.memory_space<vmem>>, %arg6: memref<1x288xf32, #tpu.memory_space<vmem>>, %arg7: memref<1x8x288xf32, #tpu.memory_space<vmem>>, %arg8: memref<8x326xbf16, #tpu.memory_space<vmem>>, %arg9: memref<36x288xbf16, #tpu.memory_space<vmem>>, %arg10: memref<72x288xbf16, #tpu.memory_space<vmem>>) attributes {dimension_semantics = [#tpu.dimension_semantics<parallel>], iteration_bounds = array<i64: 2>, scalar_prefetch = 0 : i64, scratch_operands = 3 : i64, tpu.core_type = #tpu.core_type<tc>, window_params = [{transform_indices = @transform_0, window_bounds = array<i64: 1, 4, 326>}, {pipeline_mode = #tpu.pipeline_mode<synchronous>, transform_indices = @transform_1, window_bounds = array<i64: 8, 36>}, {pipeline_mode = #tpu.pipeline_mode<synchronous>, transform_indices = @transform_2, window_bounds = array<i64: 8, 1>}, {pipeline_mode = #tpu.pipeline_mode<synchronous>, transform_indices = @transform_3, window_bounds = array<i64: 8, 72>}, {pipeline_mode = #tpu.pipeline_mode<synchronous>, transform_indices = @transform_4, window_bounds = array<i64: 8, 1>}, {pipeline_mode = #tpu.pipeline_mode<synchronous>, transform_indices = @transform_5, window_bounds = array<i64: 1, 288>}, {transform_indices = @transform_6, window_bounds = array<i64: 1, 8, 288>}]} {
    %cst = arith.constant 0.000000e+00 : bf16
    %0 = vector.broadcast %cst : bf16 to vector<8x19xbf16>
    %c0 = arith.constant 0 : index
    %c0_0 = arith.constant 0 : index
    %1 = vector.load %arg8[%c0, %c0_0] : memref<8x326xbf16, #tpu.memory_space<vmem>>, vector<8x19xbf16>
    tpu.vector_store %arg8[%c0, %c0_0], %0 {strides = array<i32>} : memref<8x326xbf16, #tpu.memory_space<vmem>>, vector<8x19xbf16>,
    %cst_1 = arith.constant 0.000000e+00 : bf16
    %2 = vector.broadcast %cst_1 : bf16 to vector<8x19xbf16>
    %c0_2 = arith.constant 0 : index
    %c307 = arith.constant 307 : index
    %3 = vector.load %arg8[%c0_2, %c307] : memref<8x326xbf16, #tpu.memory_space<vmem>>, vector<8x19xbf16>
    tpu.vector_store %arg8[%c0_2, %c307], %2 {strides = array<i32>} : memref<8x326xbf16, #tpu.memory_space<vmem>>, vector<8x19xbf16>,
    %c0_3 = arith.constant 0 : index
    %c0_4 = arith.constant 0 : index
    %4 = vector.load %arg2[%c0_3, %c0_4] : memref<8x36xbf16, #tpu.memory_space<vmem>>, vector<8x36xbf16>
    %c0_5 = arith.constant 0 : index
    %c0_6 = arith.constant 0 : index
    %5 = vector.load %arg3[%c0_5, %c0_6] : memref<8x1xf32, #tpu.memory_space<vmem>>, vector<8x1xf32>
    %c0_7 = arith.constant 0 : index
    %c0_8 = arith.constant 0 : index
    %6 = vector.load %arg4[%c0_7, %c0_8] : memref<8x72xbf16, #tpu.memory_space<vmem>>, vector<8x72xbf16>
    %c0_9 = arith.constant 0 : index
    %c0_10 = arith.constant 0 : index
    %7 = vector.load %arg5[%c0_9, %c0_10] : memref<8x1xf32, #tpu.memory_space<vmem>>, vector<8x1xf32>
    %c0_11 = arith.constant 0 : index
    %c0_12 = arith.constant 0 : index
    %8 = vector.load %arg6[%c0_11, %c0_12] : memref<1x288xf32, #tpu.memory_space<vmem>>, vector<1x288xf32>
    %c0_13 = arith.constant 0 : index
    %c0_14 = arith.constant 0 : index
    %c0_15 = arith.constant 0 : index
    %9 = vector.load %arg1[%c0_13, %c0_14, %c0_15] : memref<1x4x326xbf16, #tpu.memory_space<vmem>>, vector<1x4x326xbf16>
    %10 = vector.shape_cast %9 : vector<1x4x326xbf16> to vector<4x326xbf16>
    %11 = vector.extract_strided_slice %10 {offsets = [0, 0], sizes = [4, 288], strides = [1, 1]} : vector<4x326xbf16> to vector<4x288xbf16>
    %c0_16 = arith.constant 0 : index
    %c0_17 = arith.constant 0 : index
    %12 = vector.load %arg9[%c0_16, %c0_17] : memref<36x288xbf16, #tpu.memory_space<vmem>>, vector<4x288xbf16>
    tpu.vector_store %arg9[%c0_16, %c0_17], %11 {strides = array<i32>} : memref<36x288xbf16, #tpu.memory_space<vmem>>, vector<4x288xbf16>,
    %13 = vector.extract_strided_slice %10 {offsets = [0, 1], sizes = [4, 288], strides = [1, 1]} : vector<4x326xbf16> to vector<4x288xbf16>
    %c4 = arith.constant 4 : index
    %c0_18 = arith.constant 0 : index
    %14 = vector.load %arg9[%c4, %c0_18] : memref<36x288xbf16, #tpu.memory_space<vmem>>, vector<4x288xbf16>
    tpu.vector_store %arg9[%c4, %c0_18], %13 {strides = array<i32>} : memref<36x288xbf16, #tpu.memory_space<vmem>>, vector<4x288xbf16>,
    %15 = vector.extract_strided_slice %10 {offsets = [0, 2], sizes = [4, 288], strides = [1, 1]} : vector<4x326xbf16> to vector<4x288xbf16>
    %c8 = arith.constant 8 : index
    %c0_19 = arith.constant 0 : index
    %16 = vector.load %arg9[%c8, %c0_19] : memref<36x288xbf16, #tpu.memory_space<vmem>>, vector<4x288xbf16>
    tpu.vector_store %arg9[%c8, %c0_19], %15 {strides = array<i32>} : memref<36x288xbf16, #tpu.memory_space<vmem>>, vector<4x288xbf16>,
    %17 = vector.extract_strided_slice %10 {offsets = [0, 18], sizes = [4, 288], strides = [1, 1]} : vector<4x326xbf16> to vector<4x288xbf16>
    %c12 = arith.constant 12 : index
    %c0_20 = arith.constant 0 : index
    %18 = vector.load %arg9[%c12, %c0_20] : memref<36x288xbf16, #tpu.memory_space<vmem>>, vector<4x288xbf16>
    tpu.vector_store %arg9[%c12, %c0_20], %17 {strides = array<i32>} : memref<36x288xbf16, #tpu.memory_space<vmem>>, vector<4x288xbf16>,
    %19 = vector.extract_strided_slice %10 {offsets = [0, 19], sizes = [4, 288], strides = [1, 1]} : vector<4x326xbf16> to vector<4x288xbf16>
    %c16 = arith.constant 16 : index
    %c0_21 = arith.constant 0 : index
    %20 = vector.load %arg9[%c16, %c0_21] : memref<36x288xbf16, #tpu.memory_space<vmem>>, vector<4x288xbf16>
    tpu.vector_store %arg9[%c16, %c0_21], %19 {strides = array<i32>} : memref<36x288xbf16, #tpu.memory_space<vmem>>, vector<4x288xbf16>,
    %21 = vector.extract_strided_slice %10 {offsets = [0, 20], sizes = [4, 288], strides = [1, 1]} : vector<4x326xbf16> to vector<4x288xbf16>
    %c20 = arith.constant 20 : index
    %c0_22 = arith.constant 0 : index
    %22 = vector.load %arg9[%c20, %c0_22] : memref<36x288xbf16, #tpu.memory_space<vmem>>, vector<4x288xbf16>
    tpu.vector_store %arg9[%c20, %c0_22], %21 {strides = array<i32>} : memref<36x288xbf16, #tpu.memory_space<vmem>>, vector<4x288xbf16>,
    %23 = vector.extract_strided_slice %10 {offsets = [0, 36], sizes = [4, 288], strides = [1, 1]} : vector<4x326xbf16> to vector<4x288xbf16>
    %c24 = arith.constant 24 : index
    %c0_23 = arith.constant 0 : index
    %24 = vector.load %arg9[%c24, %c0_23] : memref<36x288xbf16, #tpu.memory_space<vmem>>, vector<4x288xbf16>
    tpu.vector_store %arg9[%c24, %c0_23], %23 {strides = array<i32>} : memref<36x288xbf16, #tpu.memory_space<vmem>>, vector<4x288xbf16>,
    %25 = vector.extract_strided_slice %10 {offsets = [0, 37], sizes = [4, 288], strides = [1, 1]} : vector<4x326xbf16> to vector<4x288xbf16>
    %c28 = arith.constant 28 : index
    %c0_24 = arith.constant 0 : index
    %26 = vector.load %arg9[%c28, %c0_24] : memref<36x288xbf16, #tpu.memory_space<vmem>>, vector<4x288xbf16>
    tpu.vector_store %arg9[%c28, %c0_24], %25 {strides = array<i32>} : memref<36x288xbf16, #tpu.memory_space<vmem>>, vector<4x288xbf16>,
    %27 = vector.extract_strided_slice %10 {offsets = [0, 38], sizes = [4, 288], strides = [1, 1]} : vector<4x326xbf16> to vector<4x288xbf16>
    %c32 = arith.constant 32 : index
    %c0_25 = arith.constant 0 : index
    %28 = vector.load %arg9[%c32, %c0_25] : memref<36x288xbf16, #tpu.memory_space<vmem>>, vector<4x288xbf16>
    tpu.vector_store %arg9[%c32, %c0_25], %27 {strides = array<i32>} : memref<36x288xbf16, #tpu.memory_space<vmem>>, vector<4x288xbf16>,
    %c0_26 = arith.constant 0 : index
    %c0_27 = arith.constant 0 : index
    %29 = vector.load %arg9[%c0_26, %c0_27] : memref<36x288xbf16, #tpu.memory_space<vmem>>, vector<36x288xbf16>
    %cst_28 = arith.constant dense<0.000000e+00> : vector<8x288xf32>
    %30 = tpu.matmul %4, %29, %cst_28 {dimension_numbers = #tpu.dot_dimension_numbers<[1], [0], [0], [1], [0, 0, 1, 1], [], []>} : vector<8x36xbf16>, vector<36x288xbf16>, vector<8x288xf32> -> vector<8x288xf32>
    %31 = vector.broadcast %5 : vector<8x1xf32> to vector<8x288xf32>
    %32 = arith.addf %30, %31 : vector<8x288xf32>
    %cst_29 = arith.constant 0.000000e+00 : f32
    %33 = vector.broadcast %cst_29 : f32 to vector<8x288xf32>
    %34 = arith.maximumf %32, %33 : vector<8x288xf32>
    %35 = vector.broadcast %8 : vector<1x288xf32> to vector<8x288xf32>
    %36 = arith.mulf %34, %35 : vector<8x288xf32>
    %37 = arith.truncf %36 : vector<8x288xf32> to vector<8x288xbf16>
    %c0_30 = arith.constant 0 : index
    %c19 = arith.constant 19 : index
    %38 = vector.load %arg8[%c0_30, %c19] : memref<8x326xbf16, #tpu.memory_space<vmem>>, vector<8x288xbf16>
    tpu.vector_store %arg8[%c0_30, %c19], %37 {strides = array<i32>} : memref<8x326xbf16, #tpu.memory_space<vmem>>, vector<8x288xbf16>,
    %c0_31 = arith.constant 0 : index
    %c0_32 = arith.constant 0 : index
    %39 = vector.load %arg8[%c0_31, %c0_32] : memref<8x326xbf16, #tpu.memory_space<vmem>>, vector<8x326xbf16>
    %40 = vector.extract_strided_slice %39 {offsets = [0, 0], sizes = [8, 288], strides = [1, 1]} : vector<8x326xbf16> to vector<8x288xbf16>
    %c0_33 = arith.constant 0 : index
    %c0_34 = arith.constant 0 : index
    %41 = vector.load %arg10[%c0_33, %c0_34] : memref<72x288xbf16, #tpu.memory_space<vmem>>, vector<8x288xbf16>
    tpu.vector_store %arg10[%c0_33, %c0_34], %40 {strides = array<i32>} : memref<72x288xbf16, #tpu.memory_space<vmem>>, vector<8x288xbf16>,
    %42 = vector.extract_strided_slice %39 {offsets = [0, 1], sizes = [8, 288], strides = [1, 1]} : vector<8x326xbf16> to vector<8x288xbf16>
    %c8_35 = arith.constant 8 : index
    %c0_36 = arith.constant 0 : index
    %43 = vector.load %arg10[%c8_35, %c0_36] : memref<72x288xbf16, #tpu.memory_space<vmem>>, vector<8x288xbf16>
    tpu.vector_store %arg10[%c8_35, %c0_36], %42 {strides = array<i32>} : memref<72x288xbf16, #tpu.memory_space<vmem>>, vector<8x288xbf16>,
    %44 = vector.extract_strided_slice %39 {offsets = [0, 2], sizes = [8, 288], strides = [1, 1]} : vector<8x326xbf16> to vector<8x288xbf16>
    %c16_37 = arith.constant 16 : index
    %c0_38 = arith.constant 0 : index
    %45 = vector.load %arg10[%c16_37, %c0_38] : memref<72x288xbf16, #tpu.memory_space<vmem>>, vector<8x288xbf16>
    tpu.vector_store %arg10[%c16_37, %c0_38], %44 {strides = array<i32>} : memref<72x288xbf16, #tpu.memory_space<vmem>>, vector<8x288xbf16>,
    %46 = vector.extract_strided_slice %39 {offsets = [0, 18], sizes = [8, 288], strides = [1, 1]} : vector<8x326xbf16> to vector<8x288xbf16>
    %c24_39 = arith.constant 24 : index
    %c0_40 = arith.constant 0 : index
    %47 = vector.load %arg10[%c24_39, %c0_40] : memref<72x288xbf16, #tpu.memory_space<vmem>>, vector<8x288xbf16>
    tpu.vector_store %arg10[%c24_39, %c0_40], %46 {strides = array<i32>} : memref<72x288xbf16, #tpu.memory_space<vmem>>, vector<8x288xbf16>,
    %48 = vector.extract_strided_slice %39 {offsets = [0, 19], sizes = [8, 288], strides = [1, 1]} : vector<8x326xbf16> to vector<8x288xbf16>
    %c32_41 = arith.constant 32 : index
    %c0_42 = arith.constant 0 : index
    %49 = vector.load %arg10[%c32_41, %c0_42] : memref<72x288xbf16, #tpu.memory_space<vmem>>, vector<8x288xbf16>
    tpu.vector_store %arg10[%c32_41, %c0_42], %48 {strides = array<i32>} : memref<72x288xbf16, #tpu.memory_space<vmem>>, vector<8x288xbf16>,
    %50 = vector.extract_strided_slice %39 {offsets = [0, 20], sizes = [8, 288], strides = [1, 1]} : vector<8x326xbf16> to vector<8x288xbf16>
    %c40 = arith.constant 40 : index
    %c0_43 = arith.constant 0 : index
    %51 = vector.load %arg10[%c40, %c0_43] : memref<72x288xbf16, #tpu.memory_space<vmem>>, vector<8x288xbf16>
    tpu.vector_store %arg10[%c40, %c0_43], %50 {strides = array<i32>} : memref<72x288xbf16, #tpu.memory_space<vmem>>, vector<8x288xbf16>,
    %52 = vector.extract_strided_slice %39 {offsets = [0, 36], sizes = [8, 288], strides = [1, 1]} : vector<8x326xbf16> to vector<8x288xbf16>
    %c48 = arith.constant 48 : index
    %c0_44 = arith.constant 0 : index
    %53 = vector.load %arg10[%c48, %c0_44] : memref<72x288xbf16, #tpu.memory_space<vmem>>, vector<8x288xbf16>
    tpu.vector_store %arg10[%c48, %c0_44], %52 {strides = array<i32>} : memref<72x288xbf16, #tpu.memory_space<vmem>>, vector<8x288xbf16>,
    %54 = vector.extract_strided_slice %39 {offsets = [0, 37], sizes = [8, 288], strides = [1, 1]} : vector<8x326xbf16> to vector<8x288xbf16>
    %c56 = arith.constant 56 : index
    %c0_45 = arith.constant 0 : index
    %55 = vector.load %arg10[%c56, %c0_45] : memref<72x288xbf16, #tpu.memory_space<vmem>>, vector<8x288xbf16>
    tpu.vector_store %arg10[%c56, %c0_45], %54 {strides = array<i32>} : memref<72x288xbf16, #tpu.memory_space<vmem>>, vector<8x288xbf16>,
    %56 = vector.extract_strided_slice %39 {offsets = [0, 38], sizes = [8, 288], strides = [1, 1]} : vector<8x326xbf16> to vector<8x288xbf16>
    %c64 = arith.constant 64 : index
    %c0_46 = arith.constant 0 : index
    %57 = vector.load %arg10[%c64, %c0_46] : memref<72x288xbf16, #tpu.memory_space<vmem>>, vector<8x288xbf16>
    tpu.vector_store %arg10[%c64, %c0_46], %56 {strides = array<i32>} : memref<72x288xbf16, #tpu.memory_space<vmem>>, vector<8x288xbf16>,
    %c0_47 = arith.constant 0 : index
    %c0_48 = arith.constant 0 : index
    %58 = vector.load %arg10[%c0_47, %c0_48] : memref<72x288xbf16, #tpu.memory_space<vmem>>, vector<72x288xbf16>
    %cst_49 = arith.constant dense<0.000000e+00> : vector<8x288xf32>
    %59 = tpu.matmul %6, %58, %cst_49 {dimension_numbers = #tpu.dot_dimension_numbers<[1], [0], [0], [1], [0, 0, 1, 1], [], []>} : vector<8x72xbf16>, vector<72x288xbf16>, vector<8x288xf32> -> vector<8x288xf32>
    %60 = vector.broadcast %7 : vector<8x1xf32> to vector<8x288xf32>
    %61 = arith.addf %59, %60 : vector<8x288xf32>
    %cst_50 = arith.constant 0.000000e+00 : f32
    %62 = vector.broadcast %cst_50 : f32 to vector<8x288xf32>
    %63 = arith.maximumf %61, %62 : vector<8x288xf32>
    %c0_51 = arith.constant 0 : index
    %c0_52 = arith.constant 0 : index
    %c0_53 = arith.constant 0 : index
    %64 = vector.load %arg7[%c0_51, %c0_52, %c0_53] : memref<1x8x288xf32, #tpu.memory_space<vmem>>, vector<1x8x288xf32>
    %65 = vector.shape_cast %64 : vector<1x8x288xf32> to vector<8x288xf32>
    %66 = vector.shape_cast %63 : vector<8x288xf32> to vector<1x8x288xf32>
    tpu.vector_store %arg7[%c0_51, %c0_52, %c0_53], %66 {strides = array<i32>} : memref<1x8x288xf32, #tpu.memory_space<vmem>>, vector<1x8x288xf32>,
    return
  }
  func.func @transform_0(%arg0: i32) -> (i32, i32, i32) {
    %c0_i32 = arith.constant 0 : i32
    %c0_i32_0 = arith.constant 0 : i32
    %c0_i32_1 = arith.constant 0 : i32
    return %arg0, %c0_i32, %c0_i32_0 : i32, i32, i32
  }
  func.func @transform_1(%arg0: i32) -> (i32, i32) {
    %c0_i32 = arith.constant 0 : i32
    %c0_i32_0 = arith.constant 0 : i32
    %c0_i32_1 = arith.constant 0 : i32
    return %c0_i32, %c0_i32_0 : i32, i32
  }
  func.func @transform_2(%arg0: i32) -> (i32, i32) {
    %c0_i32 = arith.constant 0 : i32
    %c0_i32_0 = arith.constant 0 : i32
    %c0_i32_1 = arith.constant 0 : i32
    return %c0_i32, %c0_i32_0 : i32, i32
  }
  func.func @transform_3(%arg0: i32) -> (i32, i32) {
    %c0_i32 = arith.constant 0 : i32
    %c0_i32_0 = arith.constant 0 : i32
    %c0_i32_1 = arith.constant 0 : i32
    return %c0_i32, %c0_i32_0 : i32, i32
  }
  func.func @transform_4(%arg0: i32) -> (i32, i32) {
    %c0_i32 = arith.constant 0 : i32
    %c0_i32_0 = arith.constant 0 : i32
    %c0_i32_1 = arith.constant 0 : i32
    return %c0_i32, %c0_i32_0 : i32, i32
  }
  func.func @transform_5(%arg0: i32) -> (i32, i32) {
    %c0_i32 = arith.constant 0 : i32
    %c0_i32_0 = arith.constant 0 : i32
    %c0_i32_1 = arith.constant 0 : i32
    return %c0_i32, %c0_i32_0 : i32, i32
  }
  func.func @transform_6(%arg0: i32) -> (i32, i32, i32) {
    %c0_i32 = arith.constant 0 : i32
    %c0_i32_0 = arith.constant 0 : i32
    %c0_i32_1 = arith.constant 0 : i32
    return %arg0, %c0_i32, %c0_i32_0 : i32, i32, i32
  }
}

</mosaic_0001>

<llo_original>
// kernel: tpu_custom_call.1
$region0: #{tpu_custom_call.1}
  #allocation0 [shape = 'u32[]', space=smem, size = 0x4, offset = 0x4, fixed_abs, tag = 'smem constant byte address 0x4 - core index']
  #allocation1 [shape = 'u32[72,128]{1,0:T(1,128)}', space=vmem, size = 0x9000, scoped, tag = 'internal scratch']
  #allocation2 [shape = 'bf16[8,326]{1,0:T(8,128)(2,1)}', space=vmem, size = 0x1800, scoped, tag = 'scratch operand']
  #allocation3 [shape = 'bf16[36,288]{1,0:T(8,128)(2,1)}', space=vmem, size = 0x7800, scoped, tag = 'scratch operand']
  #allocation4 [shape = 'bf16[72,288]{1,0:T(8,128)(2,1)}', space=vmem, size = 0xd800, scoped, tag = 'scratch operand']
  %s0 = inlined_call_operand.vmem [shape: bf16[2,4,326], index: 0, kind: input, shape index: {}]
  %s1 = inlined_call_operand.vmem [shape: bf16[8,36], index: 1, kind: input, shape index: {}]
  %s2 = inlined_call_operand.vmem [shape: f32[8,1], index: 2, kind: input, shape index: {}]
  %s3 = inlined_call_operand.hbm [shape: bf16[8,72], index: 3, kind: input, shape index: {}]
  %s4 = inlined_call_operand.vmem [shape: f32[8,1], index: 4, kind: input, shape index: {}]
  %s5 = inlined_call_operand.vmem [shape: f32[1,288], index: 5, kind: input, shape index: {}]
  %s6 = inlined_call_operand.hbm [shape: f32[2,8,288], index: 6, kind: output, shape index: {}]
  %s7 = sld [smem:[#allocation0]]
  $region61: #{tpu_custom_call.1} parent=0
    _
  %s9 = ssub.s32 1, %s7
  %s10 = scalar_select 0, %s9, %s7
  $region1: #{tpu_custom_call.1} parent=0
    #allocation5 [shape = 'u8[2048]{0}', space=vmem, size = 0x800, scoped, tag = 'input window, operand 3, single buffered']
    #allocation6 [shape = 's32[2]{0}', space=sflag, size = 0x8, scoped, tag = 'scoped memory for tpu_custom_call.1']
    #allocation7 [shape = 's32[2]{0}', space=sflag, size = 0x8, scoped, tag = 'scoped memory for tpu_custom_call.1']
    #allocation8 [shape = 'u8[24576]{0}', space=vmem, size = 0x6000, scoped, tag = 'output window, operand 0']
    %11 = vsyncpa [#allocation6], 0
    %12 = vsyncpa [#allocation7], 0
    %s13 = scalar_lea.sflag [#allocation7], 1
    %14 = vsyncpa %s13, 0
    loop: start=0, step=1, limit=4
    $region2: #{tpu_custom_call.1} parent=1 // loop_pre_header
      _
    $region3: #{tpu_custom_call.1} parent=1 // loop_header
      %s16 = sphi 0, %s20
      %p17 = scmp.ge.s32.totalorder %s16, 4
      %s26 = sphi 0, %s28
      %s29 = sphi 0, %s26
      %s30 = sphi 0, %s29
      %s46 = sphi 0, %s30
      %s50 = sphi 0, %s50
      %s52 = sphi 0, %s50
      %s53 = sphi 0, %s52
      %s67 = sphi 0, %s53
      %s71 = sphi 0, %s71
      %s73 = sphi 0, %s71
      %s74 = sphi 0, %s73
      %s88 = sphi 0, %s74
      %s92 = sphi 0, %s92
      %s94 = sphi 0, %s92
      %s95 = sphi 0, %s94
      %s109 = sphi 0, %s95
      %s113 = sphi 0, %s113
      %s115 = sphi 0, %s113
      %s116 = sphi 0, %s115
      %s130 = sphi 0, %s116
      %s134 = sphi 0, %s134
      %s136 = sphi 0, %s134
      %s137 = sphi 0, %s136
      %s151 = sphi 0, %s137
      %s157 = sphi 0, %s159
      %s160 = sphi 0, %s157
      %s161 = sphi 0, %s160
      %s177 = sphi 0, %s161
    $region4: #{tpu_custom_call.1} parent=1 // loop_header_branch
      %19 = sbr.rel (%p17) target = $region8
    $region5: #{tpu_custom_call.1} parent=1 // loop_body
      %s21 = ssub.s32 %s16, 1
      %s22 = ssub.s32 %s16, 2
      %s23 = sadd.s32 %s16, 1
      %s24 = ssub.s32 %s16, %s23
      %p25 = scmp.eq.s32.totalorder %s24, 0
      %s27 = sadd.s32 %s26, 1
      %s28 = scalar_select %p25, %s26, %s27
      %p31 = pneg %p25
      %p32 = scmp.eq.s32.totalorder %s16, 1
      %p33 = por %p31, %p32
      %p34 = scmp.ne.s32.totalorder %s26, %s29
      %p35 = scmp.eq.s32.totalorder %s16, 0
      %p36 = por %p34, %p35
      %p37 = scmp.ne.s32.totalorder %s26, %s29
      %p38 = scmp.eq.s32.totalorder %s21, 1
      %p39 = por %p37, %p38
      %p40 = scmp.ne.s32.totalorder %s29, %s30
      %p41 = scmp.eq.s32.totalorder %s21, 0
      %p42 = por %p40, %p41
      %p43 = scmp.ne.s32.totalorder %s29, %s30
      %p44 = scmp.eq.s32.totalorder %s22, 1
      %p45 = por %p43, %p44
      %p47 = scmp.ne.s32.totalorder %s30, %s46
      %p48 = scmp.eq.s32.totalorder %s22, 0
      %p49 = por %p47, %p48
      %s51 = sadd.s32 %s50, 1
      %p54 = scmp.eq.s32.totalorder %s16, 1
      %p55 = scmp.ne.s32.totalorder %s50, %s52
      %p56 = scmp.eq.s32.totalorder %s16, 0
      %p57 = por %p55, %p56
      %p58 = scmp.ne.s32.totalorder %s50, %s52
      %p59 = scmp.eq.s32.totalorder %s21, 1
      %p60 = por %p58, %p59
      %p61 = scmp.ne.s32.totalorder %s52, %s53
      %p62 = scmp.eq.s32.totalorder %s21, 0
      %p63 = por %p61, %p62
      %p64 = scmp.ne.s32.totalorder %s52, %s53
      %p65 = scmp.eq.s32.totalorder %s22, 1
      %p66 = por %p64, %p65
      %p68 = scmp.ne.s32.totalorder %s53, %s67
      %p69 = scmp.eq.s32.totalorder %s22, 0
      %p70 = por %p68, %p69
      %s72 = sadd.s32 %s71, 1
      %p75 = scmp.eq.s32.totalorder %s16, 1
      %p76 = scmp.ne.s32.totalorder %s71, %s73
      %p77 = scmp.eq.s32.totalorder %s16, 0
      %p78 = por %p76, %p77
      %p79 = scmp.ne.s32.totalorder %s71, %s73
      %p80 = scmp.eq.s32.totalorder %s21, 1
      %p81 = por %p79, %p80
      %p82 = scmp.ne.s32.totalorder %s73, %s74
      %p83 = scmp.eq.s32.totalorder %s21, 0
      %p84 = por %p82, %p83
      %p85 = scmp.ne.s32.totalorder %s73, %s74
      %p86 = scmp.eq.s32.totalorder %s22, 1
      %p87 = por %p85, %p86
      %p89 = scmp.ne.s32.totalorder %s74, %s88
      %p90 = scmp.eq.s32.totalorder %s22, 0
      %p91 = por %p89, %p90
      %s93 = sadd.s32 %s92, 1
      %p96 = scmp.eq.s32.totalorder %s16, 1
      %p97 = scmp.ne.s32.totalorder %s92, %s94
      %p98 = scmp.eq.s32.totalorder %s16, 0
      %p99 = por %p97, %p98
      %p100 = scmp.ne.s32.totalorder %s92, %s94
      %p101 = scmp.eq.s32.totalorder %s21, 1
      %p102 = por %p100, %p101
      %p103 = scmp.ne.s32.totalorder %s94, %s95
      %p104 = scmp.eq.s32.totalorder %s21, 0
      %p105 = por %p103, %p104
      %p106 = scmp.ne.s32.totalorder %s94, %s95
      %p107 = scmp.eq.s32.totalorder %s22, 1
      %p108 = por %p106, %p107
      %p110 = scmp.ne.s32.totalorder %s95, %s109
      %p111 = scmp.eq.s32.totalorder %s22, 0
      %p112 = por %p110, %p111
      %s114 = sadd.s32 %s113, 1
      %p117 = scmp.eq.s32.totalorder %s16, 1
      %p118 = scmp.ne.s32.totalorder %s113, %s115
      %p119 = scmp.eq.s32.totalorder %s16, 0
      %p120 = por %p118, %p119
      %p121 = scmp.ne.s32.totalorder %s113, %s115
      %p122 = scmp.eq.s32.totalorder %s21, 1
      %p123 = por %p121, %p122
      %p124 = scmp.ne.s32.totalorder %s115, %s116
      %p125 = scmp.eq.s32.totalorder %s21, 0
      %p126 = por %p124, %p125
      %p127 = scmp.ne.s32.totalorder %s115, %s116
      %p128 = scmp.eq.s32.totalorder %s22, 1
      %p129 = por %p127, %p128
      %p131 = scmp.ne.s32.totalorder %s116, %s130
      %p132 = scmp.eq.s32.totalorder %s22, 0
      %p133 = por %p131, %p132
      %s135 = sadd.s32 %s134, 1
      %p138 = scmp.eq.s32.totalorder %s16, 1
      %p139 = scmp.ne.s32.totalorder %s134, %s136
      %p140 = scmp.eq.s32.totalorder %s16, 0
      %p141 = por %p139, %p140
      %p142 = scmp.ne.s32.totalorder %s134, %s136
      %p143 = scmp.eq.s32.totalorder %s21, 1
      %p144 = por %p142, %p143
      %p145 = scmp.ne.s32.totalorder %s136, %s137
      %p146 = scmp.eq.s32.totalorder %s21, 0
      %p147 = por %p145, %p146
      %p148 = scmp.ne.s32.totalorder %s136, %s137
      %p149 = scmp.eq.s32.totalorder %s22, 1
      %p150 = por %p148, %p149
      %p152 = scmp.ne.s32.totalorder %s137, %s151
      %p153 = scmp.eq.s32.totalorder %s22, 0
      %p154 = por %p152, %p153
      %s155 = ssub.s32 %s16, %s23
      %p156 = scmp.eq.s32.totalorder %s155, 0
      %s158 = sadd.s32 %s157, 1
      %s159 = scalar_select %p156, %s157, %s158
      %p162 = pneg %p156
      %p163 = scmp.eq.s32.totalorder %s16, 1
      %p164 = por %p162, %p163
      %p165 = scmp.ne.s32.totalorder %s157, %s160
      %p166 = scmp.eq.s32.totalorder %s16, 0
      %p167 = por %p165, %p166
      %p168 = scmp.ne.s32.totalorder %s157, %s160
      %p169 = scmp.eq.s32.totalorder %s21, 1
      %p170 = por %p168, %p169
      %p171 = scmp.ne.s32.totalorder %s160, %s161
      %p172 = scmp.eq.s32.totalorder %s21, 0
      %p173 = por %p171, %p172
      %p174 = scmp.ne.s32.totalorder %s160, %s161
      %p175 = scmp.eq.s32.totalorder %s22, 1
      %p176 = por %p174, %p175
      %p178 = scmp.ne.s32.totalorder %s161, %s177
      %p179 = scmp.eq.s32.totalorder %s22, 0
      %p180 = por %p178, %p179
      %p181 = scmp.le.s32.totalorder 1, %s16
      %p182 = scmp.lt.s32.totalorder %s16, 3
      %p183 = pnand %p181, %p182
      %p184 = pneg %p183
      // Predicated region
      $region9: #{tpu_custom_call.1} parent=5 // pred_check
        _
      $region10: #{tpu_custom_call.1} parent=5 // pred_check_branch
        %186 = sbr.rel (%p183) target = $region12
      $region11: #{tpu_custom_call.1} parent=5 // pred_region
        %s187 = ssub.s32 %s16, 1
        // Predicated region
        $region13: #{tpu_custom_call.1} parent=11 // pred_check
          %p188 = pneg %p63
        $region14: #{tpu_custom_call.1} parent=11 // pred_check_branch
          %190 = sbr.rel (%p188) target = $region16
        $region15: #{tpu_custom_call.1} parent=11 // pred_region
          _
        $region16: #{tpu_custom_call.1} parent=11 // pred_fallthru
          _
        // Predicated region
        $region17: #{tpu_custom_call.1} parent=11 // pred_check
          %p191 = pneg %p84
        $region18: #{tpu_custom_call.1} parent=11 // pred_check_branch
          %193 = sbr.rel (%p191) target = $region20
        $region19: #{tpu_custom_call.1} parent=11 // pred_region
          _
        $region20: #{tpu_custom_call.1} parent=11 // pred_fallthru
          _
        // Predicated region
        $region21: #{tpu_custom_call.1} parent=11 // pred_check
          %p194 = pneg %p105
        $region22: #{tpu_custom_call.1} parent=11 // pred_check_branch
          %196 = sbr.rel (%p194) target = $region24
        $region23: #{tpu_custom_call.1} parent=11 // pred_region
          %198 = vsyncadd [#allocation6], 0
          %s200 = sshll.u32 %s3, 4
          %s201 = int_to_ptr.hbm [resolvable:$true] %s200
          %s202 = sshll.u32 [#allocation5], 4
          %s203 = int_to_ptr.vmem [resolvable:$true] %s202
          %205 = dma.hbm_to_vmem [thread:$0]  %s201, 64, %s203, [#allocation6]
        $region24: #{tpu_custom_call.1} parent=11 // pred_fallthru
          _
        // Predicated region
        $region25: #{tpu_custom_call.1} parent=11 // pred_check
          %p206 = pneg %p126
        $region26: #{tpu_custom_call.1} parent=11 // pred_check_branch
          %208 = sbr.rel (%p206) target = $region28
        $region27: #{tpu_custom_call.1} parent=11 // pred_region
          _
        $region28: #{tpu_custom_call.1} parent=11 // pred_fallthru
          _
        // Predicated region
        $region29: #{tpu_custom_call.1} parent=11 // pred_check
          %p209 = pneg %p147
        $region30: #{tpu_custom_call.1} parent=11 // pred_check_branch
          %211 = sbr.rel (%p209) target = $region32
        $region31: #{tpu_custom_call.1} parent=11 // pred_region
          _
        $region32: #{tpu_custom_call.1} parent=11 // pred_fallthru
          _
      $region12: #{tpu_custom_call.1} parent=5 // pred_fallthru
        _
      %p212 = scmp.lt.s32.totalorder %s16, 2
      // Predicated region
      $region33: #{tpu_custom_call.1} parent=5 // pred_check
        %p213 = pneg %p212
      $region34: #{tpu_custom_call.1} parent=5 // pred_check_branch
        %215 = sbr.rel (%p213) target = $region36
      $region35: #{tpu_custom_call.1} parent=5 // pred_region
        // Predicated region
        $region37: #{tpu_custom_call.1} parent=35 // pred_check
          %p216 = pneg %p36
        $region38: #{tpu_custom_call.1} parent=35 // pred_check_branch
          %218 = sbr.rel (%p216) target = $region40
        $region39: #{tpu_custom_call.1} parent=35 // pred_region
          %p219 = scmp.lt.s32.totalorder %s16, 1
          %s220 = scalar_select %p219, %s16, 1
          %s221 = smul.addr %s220, 3
          %s222 = smul.addr %s221, 2
          %s223 = scalar_lea.vmem %s0, %s222
        $region40: #{tpu_custom_call.1} parent=35 // pred_fallthru
          _
      $region36: #{tpu_custom_call.1} parent=5 // pred_fallthru
        _
      %p224 = scmp.le.s32.totalorder 1, %s16
      %p225 = scmp.lt.s32.totalorder %s16, 3
      %p226 = pnand %p224, %p225
      %p227 = pneg %p226
      // Predicated region
      $region41: #{tpu_custom_call.1} parent=5 // pred_check
        _
      $region42: #{tpu_custom_call.1} parent=5 // pred_check_branch
        %229 = sbr.rel (%p226) target = $region44
      $region43: #{tpu_custom_call.1} parent=5 // pred_region
        %s230 = ssub.s32 %s16, 1
        // Predicated region
        $region45: #{tpu_custom_call.1} parent=43 // pred_check
          %p231 = pneg %p105
        $region46: #{tpu_custom_call.1} parent=43 // pred_check_branch
          %233 = sbr.rel (%p231) target = $region48
        $region47: #{tpu_custom_call.1} parent=43 // pred_region
          %235 = dma.done [#allocation6], 64
        $region48: #{tpu_custom_call.1} parent=43 // pred_fallthru
          _
        %p236 = scmp.lt.s32.totalorder %s21, 1
        %s237 = scalar_select %p236, %s21, 1
        %s238 = smul.addr %s237, 3
        %s239 = smul.addr %s238, 2
        %s240 = scalar_lea.vmem %s0, %s239
        %p241 = pneg %p42
        %p242 = pneg %p39
        %p243 = pneg %p63
        %p244 = pneg %p60
        %p245 = pneg %p84
        %p246 = pneg %p81
        %p247 = pneg %p105
        %p248 = pneg %p102
        %p249 = pneg %p126
        %p250 = pneg %p123
        %p251 = pneg %p147
        %p252 = pneg %p144
        %p253 = pneg %p173
        %p254 = pneg %p170
        %s255 = sand.u32 %s160, 1
        %s256 = scalar_lea.sflag [#allocation7], %s255
        %s257 = sand.u32 %s160, 1
        %s258 = smul.addr %s257, 24
        %s259 = scalar_lea.vmem [#allocation8], %s258
        %p260 = scmp.lt.s32.totalorder %s21, 1
        %s261 = scalar_select %p260, %s21, 1
        %s262 = smul.addr %s261, 3
        %s263 = smul.addr %s262, 2
        %s264 = scalar_lea.vmem %s0, %s263
        %vm266 = vcmask 150528
        %267 = vst.msk [vmem:[#allocation2] sm:$0xf] %vm266, 0
        %vm268 = vcmask 568728
        %269 = vst.msk [vmem:[#allocation2 + $0x8] sm:$0xf] %vm268, 0
        %v270 = vld [vmem:[%s1] sm:$0xf]
        %v271 = vld [vmem:[%s2] sm:$0xff]
        %v272 = vld [vmem:[#allocation5] sm:$0xf]
        %v273 = vld [vmem:[%s4] sm:$0xff]
        %v274 = vld [vmem:[%s5] sm:$0x7]
        %v275 = vld [vmem:[%s264] sm:$0x3f]
        %277 = vst [vmem:[#allocation1] ss:$2 sm:$0xff] %v275
        %v278 = vld.sshfl [vmem:[#allocation1] sm:$0xff pattern:$0x75643120]
        %v279 = vld.sshfl [vmem:[#allocation1 + $0x8] sm:$0xff pattern:$0x75643120]
        %282 = vst [vmem:[#allocation3] sm:$0x33] %v278
        %vm283 = vcmask 254976
        %284 = vst.msk [vmem:[#allocation3 + $0x8] sm:$0x3] %vm283, %v279
        %s285 = scalar_lea.vmem [#allocation1], 1
        %286 = vst [vmem:[%s285] ss:$2 sm:$0xff] %v275
        %v287 = vld.sshfl [vmem:[#allocation1] sm:$0xff pattern:$0x75643120]
        %v289 = vld.sshfl [vmem:[#allocation1 + $0x8] sm:$0xff pattern:$0x75643120]
        %291 = vrot.lane.b32.xlu0 %v287, 127
        %v292 = vpop.permute.xlu0 %291
        %293 = vrot.lane.b32.xlu0 %v289, 127
        %v294 = vpop.permute.xlu0 %293
        %v295 = vrot.slane %v292, 4
        %v296 = vrot.slane %v294, 4
        %vm297 = vcmask 1043456
        %v298 = vsel %vm297, %v295, %v296
        %vm299 = vcmask 1039360
        %v300 = vsel %vm299, %v292, %v298
        %303 = vst [vmem:[#allocation3] sm:$0xcc] %v300
        %vm304 = vcmask 257026
        %305 = vst.msk [vmem:[#allocation3 + $0x8] sm:$0xc] %vm304, %v294
        %306 = vst [vmem:[#allocation1] ss:$2 sm:$0xff] %v275
        %v307 = vld.sshfl [vmem:[#allocation1] sm:$0xff pattern:$0x75643120]
        %v309 = vld.sshfl [vmem:[#allocation1 + $0x8] sm:$0xff pattern:$0x75643120]
        %311 = vrot.lane.b32.xlu0 %v307, 126
        %v312 = vpop.permute.xlu0 %311
        %313 = vrot.lane.b32.xlu0 %v309, 126
        %v314 = vpop.permute.xlu0 %313
        %v315 = vrot.slane %v312, 4
        %v316 = vrot.slane %v314, 4
        %v317 = vsel %vm297, %v315, %v316
        %vm318 = vcmask 1031168
        %v319 = vsel %vm318, %v312, %v317
        %322 = vst [vmem:[#allocation3 + $0xc] sm:$0x33] %v319
        %323 = vst.msk [vmem:[#allocation3 + $0x14] sm:$0x3] %vm283, %v314
        %s324 = scalar_lea.vmem [#allocation1], 1
        %325 = vst [vmem:[%s324] ss:$2 sm:$0xff] %v275
        %v326 = vld.sshfl [vmem:[#allocation1] sm:$0xff pattern:$0x75643120]
        %v328 = vld.sshfl [vmem:[#allocation1 + $0x8] sm:$0xff pattern:$0x75643120]
        %330 = vrot.lane.b32.xlu0 %v326, 110
        %v331 = vpop.permute.xlu0 %330
        %332 = vrot.lane.b32.xlu0 %v328, 110
        %v333 = vpop.permute.xlu0 %332
        %v334 = vrot.slane %v331, 4
        %v335 = vrot.slane %v333, 4
        %v336 = vsel %vm297, %v334, %v335
        %vm337 = vcmask 900096
        %v338 = vsel %vm337, %v331, %v336
        %341 = vst [vmem:[#allocation3 + $0xc] sm:$0xcc] %v338
        %342 = vst.msk [vmem:[#allocation3 + $0x14] sm:$0xc] %vm304, %v333
        %343 = vst [vmem:[#allocation1] ss:$2 sm:$0xff] %v275
        %v344 = vld.sshfl [vmem:[#allocation1] sm:$0xff pattern:$0x75643120]
        %v346 = vld.sshfl [vmem:[#allocation1 + $0x8] sm:$0xff pattern:$0x75643120]
        %348 = vrot.lane.b32.xlu0 %v344, 109
        %v349 = vpop.permute.xlu0 %348
        %350 = vrot.lane.b32.xlu0 %v346, 109
        %v351 = vpop.permute.xlu0 %350
        %v352 = vrot.slane %v349, 4
        %v353 = vrot.slane %v351, 4
        %v354 = vsel %vm297, %v352, %v353
        %vm355 = vcmask 891904
        %v356 = vsel %vm355, %v349, %v354
        %359 = vst [vmem:[#allocation3 + $0x18] sm:$0x33] %v356
        %360 = vst.msk [vmem:[#allocation3 + $0x20] sm:$0x3] %vm283, %v351
        %s361 = scalar_lea.vmem [#allocation1], 1
        %362 = vst [vmem:[%s361] ss:$2 sm:$0xff] %v275
        %v363 = vld.sshfl [vmem:[#allocation1] sm:$0xff pattern:$0x75643120]
        %v365 = vld.sshfl [vmem:[#allocation1 + $0x8] sm:$0xff pattern:$0x75643120]
        %367 = vrot.lane.b32.xlu0 %v363, 108
        %v368 = vpop.permute.xlu0 %367
        %369 = vrot.lane.b32.xlu0 %v365, 108
        %v370 = vpop.permute.xlu0 %369
        %v371 = vrot.slane %v368, 4
        %v372 = vrot.slane %v370, 4
        %v373 = vsel %vm297, %v371, %v372
        %vm374 = vcmask 883712
        %v375 = vsel %vm374, %v368, %v373
        %378 = vst [vmem:[#allocation3 + $0x18] sm:$0xcc] %v375
        %379 = vst.msk [vmem:[#allocation3 + $0x20] sm:$0xc] %vm304, %v370
        %380 = vst [vmem:[#allocation1] ss:$2 sm:$0xff] %v275
        %v381 = vld.sshfl [vmem:[#allocation1] sm:$0xff pattern:$0x75643120]
        %v383 = vld.sshfl [vmem:[#allocation1 + $0x8] sm:$0xff pattern:$0x75643120]
        %385 = vrot.lane.b32.xlu0 %v381, 92
        %v386 = vpop.permute.xlu0 %385
        %387 = vrot.lane.b32.xlu0 %v383, 92
        %v388 = vpop.permute.xlu0 %387
        %v389 = vrot.slane %v386, 4
        %v390 = vrot.slane %v388, 4
        %v391 = vsel %vm297, %v389, %v390
        %vm392 = vcmask 752640
        %v393 = vsel %vm392, %v386, %v391
        %396 = vst [vmem:[#allocation3 + $0x24] sm:$0x33] %v393
        %397 = vst.msk [vmem:[#allocation3 + $0x2c] sm:$0x3] %vm283, %v388
        %s398 = scalar_lea.vmem [#allocation1], 1
        %399 = vst [vmem:[%s398] ss:$2 sm:$0xff] %v275
        %v400 = vld.sshfl [vmem:[#allocation1] sm:$0xff pattern:$0x75643120]
        %v402 = vld.sshfl [vmem:[#allocation1 + $0x8] sm:$0xff pattern:$0x75643120]
        %404 = vrot.lane.b32.xlu0 %v400, 91
        %v405 = vpop.permute.xlu0 %404
        %406 = vrot.lane.b32.xlu0 %v402, 91
        %v407 = vpop.permute.xlu0 %406
        %v408 = vrot.slane %v405, 4
        %v409 = vrot.slane %v407, 4
        %v410 = vsel %vm297, %v408, %v409
        %vm411 = vcmask 744448
        %v412 = vsel %vm411, %v405, %v410
        %415 = vst [vmem:[#allocation3 + $0x24] sm:$0xcc] %v412
        %416 = vst.msk [vmem:[#allocation3 + $0x2c] sm:$0xc] %vm304, %v407
        %417 = vst [vmem:[#allocation1] ss:$2 sm:$0xff] %v275
        %v418 = vld.sshfl [vmem:[#allocation1] sm:$0xff pattern:$0x75643120]
        %v420 = vld.sshfl [vmem:[#allocation1 + $0x8] sm:$0xff pattern:$0x75643120]
        %422 = vrot.lane.b32.xlu0 %v418, 90
        %v423 = vpop.permute.xlu0 %422
        %424 = vrot.lane.b32.xlu0 %v420, 90
        %v425 = vpop.permute.xlu0 %424
        %v426 = vrot.slane %v423, 4
        %v427 = vrot.slane %v425, 4
        %v428 = vsel %vm297, %v426, %v427
        %vm429 = vcmask 736256
        %v430 = vsel %vm429, %v423, %v428
        %433 = vst [vmem:[#allocation3 + $0x30] sm:$0x33] %v430
        %434 = vst.msk [vmem:[#allocation3 + $0x38] sm:$0x3] %vm283, %v425
        %v435 = vld [vmem:[#allocation3] sm:$0xff]
        %v436 = vld [vmem:[#allocation3 + $0x8] sm:$0xf]
        %v437 = vld [vmem:[#allocation3 + $0xc] sm:$0xff]
        %v438 = vld [vmem:[#allocation3 + $0x14] sm:$0xf]
        %v439 = vld [vmem:[#allocation3 + $0x18] sm:$0xff]
        %v440 = vld [vmem:[#allocation3 + $0x20] sm:$0xf]
        %v441 = vld [vmem:[#allocation3 + $0x24] sm:$0xff]
        %v442 = vld [vmem:[#allocation3 + $0x2c] sm:$0xf]
        %v443 = vld [vmem:[#allocation3 + $0x30] sm:$0x33]
        %v444 = vld [vmem:[#allocation3 + $0x38] sm:$0x3]
        %446 = vset.pattern.permute.xlu0 0
        %447 = vperm.xlu0 %446, %v271
        %v448 = vpop.permute.xlu0 %447
        %v460 = vunpack.c.l.b16 %v435
        %v461 = vunpack.c.h.b16 %v435
        %v462 = vunpack.c.l.b16 %v436
        %v463 = vunpack.c.l.b16 %v437
        %v464 = vunpack.c.h.b16 %v437
        %v465 = vunpack.c.l.b16 %v438
        %v466 = vunpack.c.l.b16 %v439
        %v467 = vunpack.c.h.b16 %v439
        %v468 = vunpack.c.l.b16 %v440
        %v469 = vunpack.c.l.b16 %v441
        %v470 = vunpack.c.h.b16 %v441
        %v471 = vunpack.c.l.b16 %v442
        %v472 = vunpack.c.l.b16 %v443
        %v473 = vunpack.c.h.b16 %v443
        %v474 = vunpack.c.l.b16 %v444
        %v475 = vpack.c.b16 %v463, %v460
        %v476 = vpack.c.b16 %v464, %v461
        %v477 = vpack.c.b16 %v465, %v462
        %v478 = vpack.c.b16 %v469, %v466
        %v479 = vpack.c.b16 %v470, %v467
        %v480 = vpack.c.b16 %v471, %v468
        %v481 = vpack.c.b16 %v472, %v472
        %v482 = vpack.c.b16 %v473, %v473
        %v483 = vpack.c.b16 %v474, %v474
        %vm490 = vcmask 293888
        %v492 = vsel %vm490, %v270, 0
        %vm494 = vcmask 1041408
        %v496 = vsel %vm494, %v481, 0
        %v499 = vsel %vm494, %v482, 0
        %v502 = vsel %vm494, %v483, 0
        %504 = vmatpush.bf16.msra.mxu0 0
        %505 = vmatpush.bf16.msra.mxu0 0
        %506 = vmatpush.bf16.msra.mxu0 0
        %507 = vmatpush.bf16.msra.mxu0 0
        %508 = vmatpush.bf16.msra.mxu0 0
        %509 = vmatpush.bf16.msra.mxu0 %v496
        %510 = vmatpush.bf16.msra.mxu0 %v478
        %511 = vmatpush.bf16.msra.mxu0 %v475
        %512 = vmatmul.bf16.gmra.mxu0 %v492
        %v513 = vpop.f32.mrf.mxu0
        %v514 = vadd.f32 %v448, %v513
        %v515 = vpop.f32.mrf.mxu0
        %516 = vdwg.mxu0
        %517 = vmatpush.bf16.msra.mxu0 0
        %518 = vmatpush.bf16.msra.mxu0 0
        %519 = vmatpush.bf16.msra.mxu0 0
        %520 = vmatpush.bf16.msra.mxu0 0
        %521 = vmatpush.bf16.msra.mxu0 0
        %522 = vmatpush.bf16.msra.mxu0 %v499
        %523 = vmatpush.bf16.msra.mxu0 %v479
        %524 = vmatpush.bf16.msra.mxu0 %v476
        %525 = vmatmul.bf16.gmra.mxu0 %v492
        %v526 = vpop.f32.mrf.mxu0
        %v527 = vadd.f32 %v448, %v526
        %v528 = vpop.f32.mrf.mxu0
        %529 = vdwg.mxu0
        %530 = vmatpush.bf16.msra.mxu0 0
        %531 = vmatpush.bf16.msra.mxu0 0
        %532 = vmatpush.bf16.msra.mxu0 0
        %533 = vmatpush.bf16.msra.mxu0 0
        %534 = vmatpush.bf16.msra.mxu0 0
        %535 = vmatpush.bf16.msra.mxu0 %v502
        %536 = vmatpush.bf16.msra.mxu0 %v480
        %537 = vmatpush.bf16.msra.mxu0 %v477
        %538 = vmatmul.bf16.gmra.mxu0 %v492
        %v539 = vpop.f32.mrf.mxu0
        %v540 = vadd.f32 %v448, %v539
        %v541 = vpop.f32.mrf.mxu0
        %542 = vdwg.mxu0
        %v543 = vmax.f32 %v514, 0.0
        %v544 = vmax.f32 %v527, 0.0
        %v545 = vmax.f32 %v540, 0.0
        %v547 = vperm.slane %v274, 0
        %v548 = vperm.slane %v274, 1
        %v549 = vperm.slane %v274, 2
        %v553 = vmul.f32 %v543, %v547
        %v554 = vmul.f32 %v544, %v548
        %v555 = vmul.f32 %v545, %v549
        %v556 = vpack.c.bf16 %v554, %v553
        %v557 = vpack.c.bf16 %v555, %v555
        %560 = vrot.lane.b32.xlu0 %v556, 19
        %v561 = vpop.permute.xlu0 %560
        %562 = vrot.lane.b32.xlu0 %v557, 19
        %v563 = vpop.permute.xlu0 %562
        %v564 = vrot.slane %v561, 4
        %vm565 = vcmask 154624
        %v566 = vsel %vm565, %v564, %v561
        %v567 = vsel %vm565, %v564, %v563
        %vm570 = vcmask 1043608
        %vm571 = vcmask 1047556
        %vm572 = vmor %vm571, %vm570
        %573 = vst.msk [vmem:[#allocation2] sm:$0xff] %vm572, %v566
        %vm574 = vcmask 412672
        %575 = vst.msk [vmem:[#allocation2 + $0x8] sm:$0xf] %vm574, %v567
        %v576 = vld [vmem:[#allocation2] sm:$0xff]
        %v577 = vld [vmem:[#allocation2 + $0x8] sm:$0xf]
        %578 = vst [vmem:[#allocation4] sm:$0xff] %v576
        %vm579 = vcmask 257024
        %580 = vst.msk [vmem:[#allocation4 + $0x8] sm:$0xf] %vm579, %v577
        %583 = vrot.lane.b32.xlu0 %v576, 127
        %v584 = vpop.permute.xlu0 %583
        %585 = vrot.lane.b32.xlu0 %v577, 127
        %v586 = vpop.permute.xlu0 %585
        %v587 = vrot.slane %v584, 4
        %v588 = vrot.slane %v586, 4
        %v589 = vsel %vm297, %v587, %v588
        %v590 = vsel %vm299, %v584, %v589
        %593 = vst [vmem:[#allocation4 + $0xc] sm:$0xff] %v590
        %594 = vst.msk [vmem:[#allocation4 + $0x14] sm:$0xf] %vm579, %v586
        %595 = vrot.lane.b32.xlu0 %v576, 126
        %v596 = vpop.permute.xlu0 %595
        %597 = vrot.lane.b32.xlu0 %v577, 126
        %v598 = vpop.permute.xlu0 %597
        %v599 = vrot.slane %v596, 4
        %v600 = vrot.slane %v598, 4
        %v601 = vsel %vm297, %v599, %v600
        %v602 = vsel %vm318, %v596, %v601
        %605 = vst [vmem:[#allocation4 + $0x18] sm:$0xff] %v602
        %606 = vst.msk [vmem:[#allocation4 + $0x20] sm:$0xf] %vm579, %v598
        %607 = vrot.lane.b32.xlu0 %v576, 110
        %v608 = vpop.permute.xlu0 %607
        %609 = vrot.lane.b32.xlu0 %v577, 110
        %v610 = vpop.permute.xlu0 %609
        %v611 = vrot.slane %v608, 4
        %v612 = vrot.slane %v610, 4
        %v613 = vsel %vm297, %v611, %v612
        %v614 = vsel %vm337, %v608, %v613
        %617 = vst [vmem:[#allocation4 + $0x24] sm:$0xff] %v614
        %618 = vst.msk [vmem:[#allocation4 + $0x2c] sm:$0xf] %vm579, %v610
        %619 = vrot.lane.b32.xlu0 %v576, 109
        %v620 = vpop.permute.xlu0 %619
        %621 = vrot.lane.b32.xlu0 %v577, 109
        %v622 = vpop.permute.xlu0 %621
        %v623 = vrot.slane %v620, 4
        %v624 = vrot.slane %v622, 4
        %v625 = vsel %vm297, %v623, %v624
        %v626 = vsel %vm355, %v620, %v625
        %629 = vst [vmem:[#allocation4 + $0x30] sm:$0xff] %v626
        %630 = vst.msk [vmem:[#allocation4 + $0x38] sm:$0xf] %vm579, %v622
        %631 = vrot.lane.b32.xlu0 %v576, 108
        %v632 = vpop.permute.xlu0 %631
        %633 = vrot.lane.b32.xlu0 %v577, 108
        %v634 = vpop.permute.xlu0 %633
        %v635 = vrot.slane %v632, 4
        %v636 = vrot.slane %v634, 4
        %v637 = vsel %vm297, %v635, %v636
        %v638 = vsel %vm374, %v632, %v637
        %641 = vst [vmem:[#allocation4 + $0x3c] sm:$0xff] %v638
        %642 = vst.msk [vmem:[#allocation4 + $0x44] sm:$0xf] %vm579, %v634
        %643 = vrot.lane.b32.xlu0 %v576, 92
        %v644 = vpop.permute.xlu0 %643
        %645 = vrot.lane.b32.xlu0 %v577, 92
        %v646 = vpop.permute.xlu0 %645
        %v647 = vrot.slane %v644, 4
        %v648 = vrot.slane %v646, 4
        %v649 = vsel %vm297, %v647, %v648
        %v650 = vsel %vm392, %v644, %v649
        %653 = vst [vmem:[#allocation4 + $0x48] sm:$0xff] %v650
        %654 = vst.msk [vmem:[#allocation4 + $0x50] sm:$0xf] %vm579, %v646
        %655 = vrot.lane.b32.xlu0 %v576, 91
        %v656 = vpop.permute.xlu0 %655
        %657 = vrot.lane.b32.xlu0 %v577, 91
        %v658 = vpop.permute.xlu0 %657
        %v659 = vrot.slane %v656, 4
        %v660 = vrot.slane %v658, 4
        %v661 = vsel %vm297, %v659, %v660
        %v662 = vsel %vm411, %v656, %v661
        %665 = vst [vmem:[#allocation4 + $0x54] sm:$0xff] %v662
        %666 = vst.msk [vmem:[#allocation4 + $0x5c] sm:$0xf] %vm579, %v658
        %667 = vrot.lane.b32.xlu0 %v576, 90
        %v668 = vpop.permute.xlu0 %667
        %669 = vrot.lane.b32.xlu0 %v577, 90
        %v670 = vpop.permute.xlu0 %669
        %v671 = vrot.slane %v668, 4
        %v672 = vrot.slane %v670, 4
        %v673 = vsel %vm297, %v671, %v672
        %v674 = vsel %vm429, %v668, %v673
        %677 = vst [vmem:[#allocation4 + $0x60] sm:$0xff] %v674
        %678 = vst.msk [vmem:[#allocation4 + $0x68] sm:$0xf] %vm579, %v670
        %v679 = vld [vmem:[#allocation4] sm:$0xff]
        %v680 = vld [vmem:[#allocation4 + $0x8] sm:$0xf]
        %v681 = vld [vmem:[#allocation4 + $0xc] sm:$0xff]
        %v682 = vld [vmem:[#allocation4 + $0x14] sm:$0xf]
        %v683 = vld [vmem:[#allocation4 + $0x18] sm:$0xff]
        %v684 = vld [vmem:[#allocation4 + $0x20] sm:$0xf]
        %v685 = vld [vmem:[#allocation4 + $0x24] sm:$0xff]
        %v686 = vld [vmem:[#allocation4 + $0x2c] sm:$0xf]
        %v687 = vld [vmem:[#allocation4 + $0x30] sm:$0xff]
        %v688 = vld [vmem:[#allocation4 + $0x38] sm:$0xf]
        %v689 = vld [vmem:[#allocation4 + $0x3c] sm:$0xff]
        %v690 = vld [vmem:[#allocation4 + $0x44] sm:$0xf]
        %v691 = vld [vmem:[#allocation4 + $0x48] sm:$0xff]
        %v692 = vld [vmem:[#allocation4 + $0x50] sm:$0xf]
        %v693 = vld [vmem:[#allocation4 + $0x54] sm:$0xff]
        %v694 = vld [vmem:[#allocation4 + $0x5c] sm:$0xf]
        %v695 = vld [vmem:[#allocation4 + $0x60] sm:$0xff]
        %v696 = vld [vmem:[#allocation4 + $0x68] sm:$0xf]
        %698 = vset.pattern.permute.xlu0 0
        %699 = vperm.xlu0 %698, %v273
        %v700 = vpop.permute.xlu0 %699
        %v720 = vunpack.c.l.b16 %v679
        %v721 = vunpack.c.h.b16 %v679
        %v722 = vunpack.c.l.b16 %v680
        %v723 = vunpack.c.l.b16 %v681
        %v724 = vunpack.c.h.b16 %v681
        %v725 = vunpack.c.l.b16 %v682
        %v726 = vunpack.c.l.b16 %v683
        %v727 = vunpack.c.h.b16 %v683
        %v728 = vunpack.c.l.b16 %v684
        %v729 = vunpack.c.l.b16 %v685
        %v730 = vunpack.c.h.b16 %v685
        %v731 = vunpack.c.l.b16 %v686
        %v732 = vunpack.c.l.b16 %v687
        %v733 = vunpack.c.h.b16 %v687
        %v734 = vunpack.c.l.b16 %v688
        %v735 = vunpack.c.l.b16 %v689
        %v736 = vunpack.c.h.b16 %v689
        %v737 = vunpack.c.l.b16 %v690
        %v738 = vunpack.c.l.b16 %v691
        %v739 = vunpack.c.h.b16 %v691
        %v740 = vunpack.c.l.b16 %v692
        %v741 = vunpack.c.l.b16 %v693
        %v742 = vunpack.c.h.b16 %v693
        %v743 = vunpack.c.l.b16 %v694
        %v744 = vunpack.c.l.b16 %v695
        %v745 = vunpack.c.h.b16 %v695
        %v746 = vunpack.c.l.b16 %v696
        %v747 = vpack.c.b16 %v723, %v720
        %v748 = vpack.c.b16 %v724, %v721
        %v749 = vpack.c.b16 %v725, %v722
        %v750 = vpack.c.b16 %v729, %v726
        %v751 = vpack.c.b16 %v730, %v727
        %v752 = vpack.c.b16 %v731, %v728
        %v753 = vpack.c.b16 %v735, %v732
        %v754 = vpack.c.b16 %v736, %v733
        %v755 = vpack.c.b16 %v737, %v734
        %v756 = vpack.c.b16 %v741, %v738
        %v757 = vpack.c.b16 %v742, %v739
        %v758 = vpack.c.b16 %v743, %v740
        %v759 = vpack.c.b16 %v744, %v744
        %v760 = vpack.c.b16 %v745, %v745
        %v761 = vpack.c.b16 %v746, %v746
        %vm774 = vcmask 588800
        %v776 = vsel %vm774, %v272, 0
        %vm778 = vcmask 1043456
        %v780 = vsel %vm778, %v759, 0
        %v783 = vsel %vm778, %v760, 0
        %v786 = vsel %vm778, %v761, 0
        %788 = vmatpush.bf16.msra.mxu0 0
        %789 = vmatpush.bf16.msra.mxu0 0
        %790 = vmatpush.bf16.msra.mxu0 0
        %791 = vmatpush.bf16.msra.mxu0 %v780
        %792 = vmatpush.bf16.msra.mxu0 %v756
        %793 = vmatpush.bf16.msra.mxu0 %v753
        %794 = vmatpush.bf16.msra.mxu0 %v750
        %795 = vmatpush.bf16.msra.mxu0 %v747
        %796 = vmatmul.bf16.gmra.mxu0 %v776
        %v797 = vpop.f32.mrf.mxu0
        %v798 = vadd.f32 %v700, %v797
        %v799 = vpop.f32.mrf.mxu0
        %800 = vdwg.mxu0
        %801 = vmatpush.bf16.msra.mxu0 0
        %802 = vmatpush.bf16.msra.mxu0 0
        %803 = vmatpush.bf16.msra.mxu0 0
        %804 = vmatpush.bf16.msra.mxu0 %v783
        %805 = vmatpush.bf16.msra.mxu0 %v757
        %806 = vmatpush.bf16.msra.mxu0 %v754
        %807 = vmatpush.bf16.msra.mxu0 %v751
        %808 = vmatpush.bf16.msra.mxu0 %v748
        %809 = vmatmul.bf16.gmra.mxu0 %v776
        %v810 = vpop.f32.mrf.mxu0
        %v811 = vadd.f32 %v700, %v810
        %v812 = vpop.f32.mrf.mxu0
        %813 = vdwg.mxu0
        %814 = vmatpush.bf16.msra.mxu0 0
        %815 = vmatpush.bf16.msra.mxu0 0
        %816 = vmatpush.bf16.msra.mxu0 0
        %817 = vmatpush.bf16.msra.mxu0 %v786
        %818 = vmatpush.bf16.msra.mxu0 %v758
        %819 = vmatpush.bf16.msra.mxu0 %v755
        %820 = vmatpush.bf16.msra.mxu0 %v752
        %821 = vmatpush.bf16.msra.mxu0 %v749
        %822 = vmatmul.bf16.gmra.mxu0 %v776
        %v823 = vpop.f32.mrf.mxu0
        %v824 = vadd.f32 %v700, %v823
        %v825 = vpop.f32.mrf.mxu0
        %826 = vdwg.mxu0
        %v827 = vmax.f32 %v798, 0.0
        %v828 = vmax.f32 %v811, 0.0
        %v829 = vmax.f32 %v824, 0.0
        %830 = vst [vmem:[%s259] sm:$0xff] %v827
        %831 = vst [vmem:[%s259 + $0x8] sm:$0xff] %v828
        %vm832 = vcmask 261120
        %833 = vst.msk [vmem:[%s259 + $0x10] sm:$0xff] %vm832, %v829
        %s834 = sand.u32 %s160, 1
        %s835 = scalar_lea.sflag [#allocation7], %s834
        %s836 = sand.u32 %s160, 1
        %s837 = smul.addr %s836, 24
        %s838 = scalar_lea.vmem [#allocation8], %s837
        // Predicated region
        $region49: #{tpu_custom_call.1} parent=43 // pred_check
          %p839 = pneg %p170
        $region50: #{tpu_custom_call.1} parent=43 // pred_check_branch
          %841 = sbr.rel (%p839) target = $region52
        $region51: #{tpu_custom_call.1} parent=43 // pred_region
          %843 = vsyncadd %s835, 0
          %s844 = smul.addr %s21, 3
          %s845 = smul.addr %s844, 8
          %s846 = scalar_lea.hbm %s6, %s845
          %s848 = sshll.u32 %s838, 4
          %s849 = int_to_ptr.vmem [resolvable:$true] %s848
          %s850 = sshll.u32 %s846, 4
          %s851 = int_to_ptr.hbm [resolvable:$true] %s850
          %853 = dma.vmem_to_hbm [thread:$0]  %s849, 384, %s851, %s835
        $region52: #{tpu_custom_call.1} parent=43 // pred_fallthru
          _
      $region44: #{tpu_custom_call.1} parent=5 // pred_fallthru
        _
      %p854 = scmp.le.s32.totalorder 2, %s16
      // Predicated region
      $region53: #{tpu_custom_call.1} parent=5 // pred_check
        %p855 = pneg %p854
      $region54: #{tpu_custom_call.1} parent=5 // pred_check_branch
        %857 = sbr.rel (%p855) target = $region56
      $region55: #{tpu_custom_call.1} parent=5 // pred_region
        %s858 = ssub.s32 %s16, 2
        // Predicated region
        $region57: #{tpu_custom_call.1} parent=55 // pred_check
          %p859 = pneg %p176
        $region58: #{tpu_custom_call.1} parent=55 // pred_check_branch
          %861 = sbr.rel (%p859) target = $region60
        $region59: #{tpu_custom_call.1} parent=55 // pred_region
          %s862 = sand.u32 %s161, 1
          %s863 = scalar_lea.sflag [#allocation7], %s862
          %s864 = sand.u32 %s161, 1
          %s865 = smul.addr %s864, 24
          %s866 = scalar_lea.vmem [#allocation8], %s865
          %868 = dma.done %s863, 384
        $region60: #{tpu_custom_call.1} parent=55 // pred_fallthru
          _
      $region56: #{tpu_custom_call.1} parent=5 // pred_fallthru
        _
    $region6: #{tpu_custom_call.1} parent=1 // loop_footer
      %s20 = sadd.s32 1, %s16
    $region7: #{tpu_custom_call.1} parent=1 // loop_footer_branch
      %15 = sbr.rel target = $region3
    $region8: #{tpu_custom_call.1} parent=1 // loop_exit
      _
    %869 = vsyncpa [#allocation6], 1
    %s870 = scalar_lea.sflag [#allocation6], 1
    %871 = vsyncpa %s870, 1
    %872 = vsyncpa [#allocation7], 1
    %s873 = scalar_lea.sflag [#allocation7], 1
    %874 = vsyncpa %s873, 1

</llo_original>
